<compile_context>
chip_gen: v5e
topology: v5e:2x2
jax: 0.10.0
libtpu: 0.0.40
codegen_flags: <defaults>
</compile_context>

<pallas_src>
import math
from functools import partial

import jax
import jax.numpy as jnp
from jax.experimental import pallas as pl
from jax.experimental.pallas import tpu as pltpu


def _round_up(x, m):
    return ((x + m - 1) // m) * m


# ---------------------------------------------------------------------------
# Pallas kernel: one MXU matmul per node tile, full weight resident in VMEM.
# ---------------------------------------------------------------------------
def _fused_linear_kernel(x_ref, w_ref, o_ref):
    o_ref[...] = jnp.dot(
        x_ref[...], w_ref[...], preferred_element_type=jnp.float32
    ).astype(o_ref.dtype)


def _choose_tile_m(n, k_pad, d_pad, itemsize, tile_m, vmem_budget_bytes):
    """Node tile: multiple of 8, <= padded node count, fits the VMEM budget
    together with double-buffered in/out tiles and the resident weight."""
    tile_m = max(8, min(_round_up(tile_m, 8), _round_up(n, 8)))
    while tile_m > 8 and (
        2 * tile_m * k_pad + 2 * tile_m * d_pad + k_pad * d_pad
    ) * itemsize > vmem_budget_bytes:
        tile_m = max(8, _round_up(tile_m // 2, 8))
    return tile_m


@partial(jax.jit, static_argnames=("dim_out", "tile_m", "vmem_budget_bytes"))
def fused_linear(x, w_padded, dim_out, *, tile_m=512, vmem_budget_bytes=24 << 20):
    """(N, K) @ pre-padded (K_pad, D_pad) via a single node-tiled Pallas call."""
    n, k = x.shape
    k_pad, d_pad = w_padded.shape
    dtype = x.dtype
    itemsize = jnp.dtype(dtype).itemsize

    tile_m = _choose_tile_m(n, k_pad, d_pad, itemsize, tile_m, vmem_budget_bytes)
    m_pad = _round_up(n, tile_m)

    # Single pad op (fused under jit); weight is already padded at init time.
    x_p = jnp.pad(x, ((0, m_pad - n), (0, k_pad - k)))

    out = pl.pallas_call(
        _fused_linear_kernel,
        out_shape=jax.ShapeDtypeStruct((m_pad, d_pad), dtype),
        grid=(m_pad // tile_m,),
        in_specs=[
            pl.BlockSpec((tile_m, k_pad), lambda i: (i, 0)),
            pl.BlockSpec((k_pad, d_pad), lambda i: (0, 0)),  # VMEM-resident
        ],
        out_specs=pl.BlockSpec((tile_m, d_pad), lambda i: (i, 0)),
        compiler_params=pltpu.CompilerParams(
            dimension_semantics=("parallel",)
        ),
        cost_estimate=pl.CostEstimate(
            flops=2 * m_pad * k_pad * d_pad,
            transcendentals=0,
            bytes_accessed=(m_pad * k_pad + k_pad * d_pad + m_pad * d_pad)
            * itemsize,
        ),
    )(x_p, w_padded)
    return out[:n, :dim_out]


# ---------------------------------------------------------------------------
# e3nn-style irreps bookkeeping (irreps = list of (mul, l); parity follows l).
# ---------------------------------------------------------------------------
def _irreps_slices(irreps):
    slices, start = [], 0
    for mul, l in irreps:
        dim = mul * (2 * l + 1)
        slices.append((start, start + dim, mul, l))
        start += dim
    return slices, start


def init_linear_weights(key, irreps_in, irreps_out):
    """One (mul_in, mul_out) weight per matching (l_in == l_out) path, ~N(0,1)."""
    in_sl, _ = _irreps_slices(irreps_in)
    out_sl, _ = _irreps_slices(irreps_out)
    weights = {}
    for (os, oe, mul_out, l_out) in out_sl:
        for (s, e, mul_in, l_in) in in_sl:
            if l_in == l_out:
                key, sub = jax.random.split(key)
                weights[(s, os)] = jax.random.normal(
                    sub, (mul_in, mul_out), dtype=jnp.float32
                )
    return weights


def pack_dense_weight_padded(weights, irreps_in, irreps_out,
                             dtype=jnp.float32, align=128):
    """Fold every path (and its 1/sqrt(fan_in) scale) into ONE dense, already
    zero-padded (K_pad, D_pad) matrix — done once at init time.

    Each (l_in == l_out) path contributes alpha * (w ⊗ I_{2l+1}) at its
    (input-slice, output-slice) block in e3nn's channel-major layout; all
    other entries (including the padding) are zero, so unmatched output
    irreps stay zero exactly as in e3nn.
    Returns (w_padded, dim_in, dim_out).
    """
    in_sl, dim_in = _irreps_slices(irreps_in)
    out_sl, dim_out = _irreps_slices(irreps_out)
    k_pad = _round_up(dim_in, align)
    d_pad = _round_up(dim_out, align)
    W = jnp.zeros((k_pad, d_pad), jnp.float32)
    for (os, oe, mul_out, l_out) in out_sl:
        matched = [(s, e, m, l) for (s, e, m, l) in in_sl if l == l_out]
        if not matched:
            continue  # unmatched output irrep stays zero (e3nn behavior)
        # path_normalization='element': 1/sqrt(total input multiplicity).
        # TODO(synk): if used with path_normalization='path', make alpha per-path.
        alpha = 1.0 / math.sqrt(sum(m for _, _, m, _ in matched))
        eye = jnp.eye(2 * l_out + 1, dtype=jnp.float32)
        for (s, e, mul_in, _) in matched:
            block = alpha * jnp.kron(weights[(s, os)], eye)
            W = W.at[s:e, os:oe].set(block)
    return W.astype(dtype), dim_in, dim_out


def linear_node_embedding_forward(node_attrs, w_padded, dim_out):
    """Forward of LinearNodeEmbeddingBlock (== o3.Linear) — one Pallas matmul."""
    return fused_linear(node_attrs, w_padded, dim_out)


# Pure-JAX reference for a correctness check (same math, no Pallas, no packing).
def _reference_forward(node_attrs, irreps_in, irreps_out, weights):
    in_sl, _ = _irreps_slices(irreps_in)
    out_sl, _ = _irreps_slices(irreps_out)
    n = node_attrs.shape[0]
    segs = []
    for (os, oe, mul_out, l_out) in out_sl:
        matched = [(s, e, m, l) for (s, e, m, l) in in_sl if l == l_out]
        dim_ir = 2 * l_out + 1
        if not matched:
            segs.append(jnp.zeros((n, mul_out * dim_ir), node_attrs.dtype))
            continue
        alpha = 1.0 / math.sqrt(sum(m for _, _, m, _ in matched))
        y = jnp.zeros((n, mul_out, dim_ir), jnp.float32)
        for (s, e, mul_in, _) in matched:
            xseg = node_attrs[:, s:e].reshape(n, mul_in, dim_ir)
            y = y + alpha * jnp.einsum("nim,io->nom", xseg, weights[(s, os)])
        segs.append(y.reshape(n, mul_out * dim_ir).astype(node_attrs.dtype))
    return jnp.concatenate(segs, axis=1)


if __name__ == "__main__":
    # Typical node-embedding irreps: scalar one-hot in, scalars (+ an l=1 block
    # to exercise the general Kronecker path) out.
    irreps_in = [(8, 0), (4, 1)]     # "8x0e + 4x1o"   -> dim 8 + 12 = 20
    irreps_out = [(32, 0), (16, 1)]  # "32x0e + 16x1o" -> dim 32 + 48 = 80
    num_nodes = 16

    key = jax.random.PRNGKey(0)
    key_x, key_w = jax.random.split(key)
    _, dim_in = _irreps_slices(irreps_in)
    node_attrs = jax.random.normal(key_x, (num_nodes, dim_in), dtype=jnp.float32)
    weights = init_linear_weights(key_w, irreps_in, irreps_out)

    # One-time packing + padding (init time), then a single fused Pallas matmul.
    w_padded, _, dim_out = pack_dense_weight_padded(
        weights, irreps_in, irreps_out, dtype=node_attrs.dtype
    )
    out = linear_node_embedding_forward(node_attrs, w_padded, dim_out)
    out = jax.block_until_ready(out)

    ref = _reference_forward(node_attrs, irreps_in, irreps_out, weights)
    assert out.shape == (num_nodes, dim_out), out.shape
    assert jnp.allclose(out, ref, atol=1e-5, rtol=1e-5), "mismatch vs reference"

    print("KERNEL_OK")
</pallas_src>

<mosaic_0001>
module attributes {stable_mosaic.version = 11 : i64} {
  func.func @_fused_linear_kernel(%arg0: i32, %arg1: memref<16x128xf32, #tpu.memory_space<vmem>>, %arg2: memref<128x128xf32, #tpu.memory_space<vmem>>, %arg3: memref<16x128xf32, #tpu.memory_space<vmem>>) attributes {dimension_semantics = [#tpu.dimension_semantics<parallel>], iteration_bounds = array<i64: 1>, scalar_prefetch = 0 : i64, scratch_operands = 0 : i64, tpu.core_type = #tpu.core_type<tc>, window_params = [{transform_indices = @transform_0, window_bounds = array<i64: 16, 128>}, {pipeline_mode = #tpu.pipeline_mode<synchronous>, transform_indices = @transform_1, window_bounds = array<i64: 128, 128>}, {transform_indices = @transform_2, window_bounds = array<i64: 16, 128>}]} {
    %c0 = arith.constant 0 : index
    %c0_0 = arith.constant 0 : index
    %0 = vector.load %arg1[%c0, %c0_0] : memref<16x128xf32, #tpu.memory_space<vmem>>, vector<16x128xf32>
    %c0_1 = arith.constant 0 : index
    %c0_2 = arith.constant 0 : index
    %1 = vector.load %arg2[%c0_1, %c0_2] : memref<128x128xf32, #tpu.memory_space<vmem>>, vector<128x128xf32>
    %cst = arith.constant dense<0.000000e+00> : vector<16x128xf32>
    %2 = tpu.matmul %0, %1, %cst {dimension_numbers = #tpu.dot_dimension_numbers<[1], [0], [0], [1], [0, 0, 1, 1], [], []>} : vector<16x128xf32>, vector<128x128xf32>, vector<16x128xf32> -> vector<16x128xf32>
    %c0_3 = arith.constant 0 : index
    %c0_4 = arith.constant 0 : index
    %3 = vector.load %arg3[%c0_3, %c0_4] : memref<16x128xf32, #tpu.memory_space<vmem>>, vector<16x128xf32>
    tpu.vector_store %arg3[%c0_3, %c0_4], %2 {strides = array<i32>} : memref<16x128xf32, #tpu.memory_space<vmem>>, vector<16x128xf32>,
    return
  }
  func.func @transform_0(%arg0: i32) -> (i32, i32) {
    %c0_i32 = arith.constant 0 : i32
    %c0_i32_0 = arith.constant 0 : i32
    return %arg0, %c0_i32 : i32, i32
  }
  func.func @transform_1(%arg0: i32) -> (i32, i32) {
    %c0_i32 = arith.constant 0 : i32
    %c0_i32_0 = arith.constant 0 : i32
    %c0_i32_1 = arith.constant 0 : i32
    return %c0_i32, %c0_i32_0 : i32, i32
  }
  func.func @transform_2(%arg0: i32) -> (i32, i32) {
    %c0_i32 = arith.constant 0 : i32
    %c0_i32_0 = arith.constant 0 : i32
    return %arg0, %c0_i32 : i32, i32
  }
}

</mosaic_0001>

<llo_original>
// kernel: fused_linear.1
$region0: #{fused_linear.1}
  #allocation0 [shape = 'u32[]', space=smem, size = 0x4, offset = 0x4, fixed_abs, tag = 'smem constant byte address 0x4 - core index']
  #allocation1 [shape = 'u32[72,128]{1,0:T(1,128)}', space=vmem, size = 0x9000, scoped, tag = 'internal scratch']
  %s0 = inlined_call_operand.vmem [shape: f32[16,128], index: 0, kind: input, shape index: {}]
  %s1 = inlined_call_operand.hbm [shape: f32[128,128], index: 1, kind: input, shape index: {}]
  %s2 = inlined_call_operand.hbm [shape: f32[16,128], index: 2, kind: output, shape index: {}]
  %s3 = sld [smem:[#allocation0]]
  $region22: #{fused_linear.1} parent=0
    _
  %s5 = ssub.s32 1, %s3
  %s6 = scalar_select 0, %s5, %s3
  $region1: #{fused_linear.1} parent=0
    #allocation2 [shape = 'u8[65536]{0}', space=vmem, size = 0x10000, scoped, tag = 'input window, operand 1, single buffered']
    #allocation3 [shape = 's32[1]{0}', space=sflag, size = 0x4, scoped, tag = 'scoped memory for fused_linear.1']
    #allocation4 [shape = 's32[1]{0}', space=sflag, size = 0x4, scoped, tag = 'scoped memory for fused_linear.1']
    #allocation5 [shape = 'u8[8192]{0}', space=vmem, size = 0x2000, scoped, tag = 'output window, operand 0, single buffered']
    %7 = vsyncpa [#allocation3], 0
    %8 = vsyncpa [#allocation4], 0
    // Predicated region
    $region2: #{fused_linear.1} parent=1 // pred_check
      _
    $region3: #{fused_linear.1} parent=1 // pred_check_branch
      %10 = sbr.rel (0) target = $region5
    $region4: #{fused_linear.1} parent=1 // pred_region
      _
    $region5: #{fused_linear.1} parent=1 // pred_fallthru
      _
    // Predicated region
    $region6: #{fused_linear.1} parent=1 // pred_check
      _
    $region7: #{fused_linear.1} parent=1 // pred_check_branch
      %12 = sbr.rel (0) target = $region9
    $region8: #{fused_linear.1} parent=1 // pred_region
      %14 = vsyncadd [#allocation3], 0
      %s15 = sshll.u32 %s1, 4
      %s16 = int_to_ptr.hbm [resolvable:$true] %s15
      %s17 = sshll.u32 [#allocation2], 4
      %s18 = int_to_ptr.vmem [resolvable:$true] %s17
      %23 = dma.hbm_to_vmem [thread:$0]  %s16, 2048, %s18, [#allocation3], 128, 128, 8
    $region9: #{fused_linear.1} parent=1 // pred_fallthru
      _
    // Predicated region
    $region10: #{fused_linear.1} parent=1 // pred_check
      _
    $region11: #{fused_linear.1} parent=1 // pred_check_branch
      %25 = sbr.rel (0) target = $region13
    $region12: #{fused_linear.1} parent=1 // pred_region
      %27 = dma.done [#allocation3], 2048
    $region13: #{fused_linear.1} parent=1 // pred_fallthru
      _
    %v28 = vld [vmem:[%s0] sm:$0xff]
    %v29 = vld [vmem:[%s0 + $0x8] sm:$0xff]
    %v30 = vld [vmem:[#allocation2] sm:$0xff]
    %v31 = vld [vmem:[#allocation2 + $0x8] sm:$0xff]
    %v32 = vld [vmem:[#allocation2 + $0x10] sm:$0xff]
    %v33 = vld [vmem:[#allocation2 + $0x18] sm:$0xff]
    %v34 = vld [vmem:[#allocation2 + $0x20] sm:$0xff]
    %v35 = vld [vmem:[#allocation2 + $0x28] sm:$0xff]
    %v36 = vld [vmem:[#allocation2 + $0x30] sm:$0xff]
    %v37 = vld [vmem:[#allocation2 + $0x38] sm:$0xff]
    %v38 = vld [vmem:[#allocation2 + $0x40] sm:$0xff]
    %v39 = vld [vmem:[#allocation2 + $0x48] sm:$0xff]
    %v40 = vld [vmem:[#allocation2 + $0x50] sm:$0xff]
    %v41 = vld [vmem:[#allocation2 + $0x58] sm:$0xff]
    %v42 = vld [vmem:[#allocation2 + $0x60] sm:$0xff]
    %v43 = vld [vmem:[#allocation2 + $0x68] sm:$0xff]
    %v44 = vld [vmem:[#allocation2 + $0x70] sm:$0xff]
    %v45 = vld [vmem:[#allocation2 + $0x78] sm:$0xff]
    %46 = vmatpush.msra.mxu0 %v45
    %47 = vmatpush.msra.mxu0 %v44
    %48 = vmatpush.msra.mxu0 %v43
    %49 = vmatpush.msra.mxu0 %v42
    %50 = vmatpush.msra.mxu0 %v41
    %51 = vmatpush.msra.mxu0 %v40
    %52 = vmatpush.msra.mxu0 %v39
    %53 = vmatpush.msra.mxu0 %v38
    %54 = vmatpush.msra.mxu0 %v37
    %55 = vmatpush.msra.mxu0 %v36
    %56 = vmatpush.msra.mxu0 %v35
    %57 = vmatpush.msra.mxu0 %v34
    %58 = vmatpush.msra.mxu0 %v33
    %59 = vmatpush.msra.mxu0 %v32
    %60 = vmatpush.msra.mxu0 %v31
    %61 = vmatpush.msra.mxu0 %v30
    %62 = vmatmul.f32.gmra.mxu0 %v28
    %v63 = vpop.f32.mrf.mxu0
    %v64 = vadd.f32 0.0, %v63
    %65 = vmatmul.f32.gmra.mxu0 %v29
    %v66 = vpop.f32.mrf.mxu0
    %v67 = vadd.f32 0.0, %v66
    %68 = vdwg.mxu0
    %69 = vst [vmem:[#allocation5] sm:$0xff] %v64
    %70 = vst [vmem:[#allocation5 + $0x8] sm:$0xff] %v67
    // Predicated region
    $region14: #{fused_linear.1} parent=1 // pred_check
      _
    $region15: #{fused_linear.1} parent=1 // pred_check_branch
      %72 = sbr.rel (0) target = $region17
    $region16: #{fused_linear.1} parent=1 // pred_region
      %74 = vsyncadd [#allocation4], 0
      %s75 = sshll.u32 [#allocation5], 4
      %s76 = int_to_ptr.vmem [resolvable:$true] %s75
      %s77 = sshll.u32 %s2, 4
      %s78 = int_to_ptr.hbm [resolvable:$true] %s77
      %83 = dma.vmem_to_hbm [thread:$0]  %s76, 256, %s78, [#allocation4], 128, 128, 8
    $region17: #{fused_linear.1} parent=1 // pred_fallthru
      _
    // Predicated region
    $region18: #{fused_linear.1} parent=1 // pred_check
      _
    $region19: #{fused_linear.1} parent=1 // pred_check_branch
      %85 = sbr.rel (0) target = $region21
    $region20: #{fused_linear.1} parent=1 // pred_region
      %87 = dma.done [#allocation4], 256
    $region21: #{fused_linear.1} parent=1 // pred_fallthru
      _
    %88 = vsyncpa [#allocation3], 1
    %89 = vsyncpa [#allocation4], 1

</llo_original>
